<compile_context>
chip_gen: v6e
topology: v6e:2x2x1
jax: 0.10.0
libtpu: 0.0.40
codegen_flags: <defaults>
</compile_context>

<pallas_src>
import jax
import jax.numpy as jnp
from jax.experimental import pallas as pl
from jax.experimental.pallas import tpu as pltpu


def _cdiv(a, b):
    return (a + b - 1) // b


def _round_up(a, m):
    return ((a + m - 1) // m) * m


def dqn_forward_kernel(x_ref,
                       w1_ref, b1_ref,
                       w2_ref, b2_ref,
                       w3_ref, b3_ref,
                       w4_ref, b4_ref,
                       out_ref):
    """Fused 4-layer MLP: relu(fc1) -> relu(fc2) -> relu(fc3) -> fc4 (no activation)."""
    x = x_ref[...]  # (TB, input_dim), f32

    # fc1 on the VPU: K = input_dim is tiny (2); broadcast FMAs beat an MXU pass.
    # Kept in f32 (v5e VPU has no bf16 path; this is off the MXU critical unit).
    input_dim = x_ref.shape[1]
    h1 = b1_ref[...]                                   # (1, fc1) broadcasts over rows
    for k in range(input_dim):                         # static, tiny trip count
        h1 = h1 + x[:, k:k + 1] * w1_ref[k:k + 1, :]   # (TB,1)*(1,fc1) -> (TB,fc1)
    h1 = jnp.maximum(h1, 0.0)

    # fc2/fc3/fc4 on the MXU with bf16 operands, f32 accumulation; bias/ReLU in f32.
    h2 = jnp.dot(h1.astype(jnp.bfloat16), w2_ref[...],
                 preferred_element_type=jnp.float32) + b2_ref[...]
    h2 = jnp.maximum(h2, 0.0)

    h3 = jnp.dot(h2.astype(jnp.bfloat16), w3_ref[...],
                 preferred_element_type=jnp.float32) + b3_ref[...]
    h3 = jnp.maximum(h3, 0.0)

    actions = jnp.dot(h3.astype(jnp.bfloat16), w4_ref[...],
                      preferred_element_type=jnp.float32) + b4_ref[...]
    out_ref[...] = actions.astype(out_ref.dtype)


def dqn_forward(state, params, *, block_rows=2048):
    """state: (B, input_dim) f32. params: dict of (W, b) per layer, W as (in, out) f32."""
    w1, b1 = params["fc1"]
    w2, b2 = params["fc2"]
    w3, b3 = params["fc3"]
    w4, b4 = params["fc4"]

    B, input_dim = state.shape
    n_actions = w4.shape[1]

    # Balanced batch tiling:
    #  - number of grid steps driven by block_rows,
    #  - forced to >= 2 steps when B > 8 so the "parallel" axis actually shards
    #    across v7x's two TensorCores (harmless on single-TC v5e/v6e),
    #  - tb = round_up(cdiv(B, n_steps), 8) keeps tail padding small and balanced.
    n_steps = max(1, _cdiv(B, block_rows))
    if B > 8 and n_steps < 2:
        n_steps = 2
    tb = _round_up(_cdiv(B, n_steps), 8)
    padded_b = tb * n_steps
    if padded_b != B:
        state = jnp.pad(state, ((0, padded_b - B), (0, 0)))
    grid = (n_steps,)

    # bf16 weights for the MXU layers (weights are tiny and VMEM-resident).
    w2_b = w2.astype(jnp.bfloat16)
    w3_b = w3.astype(jnp.bfloat16)
    w4_b = w4.astype(jnp.bfloat16)

    def resident(arr2d_shape):
        # Same block every grid step => the array stays resident in VMEM.
        return pl.BlockSpec(arr2d_shape, lambda i: (0, 0))

    in_specs = [
        pl.BlockSpec((tb, input_dim), lambda i: (i, 0)),   # state tile, pipelined
        resident(w1.shape), resident((1, b1.shape[0])),
        resident(w2_b.shape), resident((1, b2.shape[0])),
        resident(w3_b.shape), resident((1, b3.shape[0])),
        resident(w4_b.shape), resident((1, b4.shape[0])),
    ]
    out_spec = pl.BlockSpec((tb, n_actions), lambda i: (i, 0))

    # Advisory cost estimate so XLA can schedule replay-buffer ops around this call.
    flops = 2 * padded_b * (input_dim * w1.shape[1]
                            + w1.shape[1] * w2.shape[1]
                            + w2.shape[1] * w3.shape[1]
                            + w3.shape[1] * n_actions)
    param_bytes = 4 * sum(int(w.size) + int(b.size)
                          for (w, b) in (params["fc1"], params["fc2"],
                                         params["fc3"], params["fc4"]))
    bytes_accessed = 4 * padded_b * (input_dim + n_actions) + param_bytes

    out = pl.pallas_call(
        dqn_forward_kernel,
        out_shape=jax.ShapeDtypeStruct((padded_b, n_actions), jnp.float32),
        grid=grid,
        in_specs=in_specs,
        out_specs=out_spec,
        compiler_params=pltpu.CompilerParams(
            dimension_semantics=("parallel",),          # shards batch on v7x's 2 TCs
            vmem_limit_bytes=32 * 1024 * 1024,          # generous; v7x-safe (64 MiB phys)
        ),
        cost_estimate=pl.CostEstimate(
            flops=flops, transcendentals=0, bytes_accessed=bytes_accessed),
    )(state,
      w1, b1.reshape(1, -1),
      w2_b, b2.reshape(1, -1),
      w3_b, b3.reshape(1, -1),
      w4_b, b4.reshape(1, -1))

    return out[:B] if padded_b != B else out


def init_linear(key, fan_in, fan_out):
    """PyTorch-style nn.Linear init: U(-1/sqrt(fan_in), 1/sqrt(fan_in)).
    Returns W with shape (fan_in, fan_out) (already transposed vs. torch)."""
    kw, kb = jax.random.split(key)
    bound = 1.0 / jnp.sqrt(jnp.float32(fan_in))
    W = jax.random.uniform(kw, (fan_in, fan_out), jnp.float32, -bound, bound)
    b = jax.random.uniform(kb, (fan_out,), jnp.float32, -bound, bound)
    return W, b


def reference_forward_f32(state, params):
    """Pure f32 reference of the module's math."""
    w1, b1 = params["fc1"]
    w2, b2 = params["fc2"]
    w3, b3 = params["fc3"]
    w4, b4 = params["fc4"]
    x = jnp.maximum(state @ w1 + b1, 0.0)
    x = jnp.maximum(x @ w2 + b2, 0.0)
    x = jnp.maximum(x @ w3 + b3, 0.0)
    return x @ w4 + b4


def reference_forward_matched(state, params):
    """Reference that mirrors the kernel's precision choices (bf16 MXU operands)."""
    w1, b1 = params["fc1"]
    w2, b2 = params["fc2"]
    w3, b3 = params["fc3"]
    w4, b4 = params["fc4"]
    x = jnp.maximum(state @ w1 + b1, 0.0)
    x = jnp.maximum(jnp.dot(x.astype(jnp.bfloat16), w2.astype(jnp.bfloat16),
                            preferred_element_type=jnp.float32) + b2, 0.0)
    x = jnp.maximum(jnp.dot(x.astype(jnp.bfloat16), w3.astype(jnp.bfloat16),
                            preferred_element_type=jnp.float32) + b3, 0.0)
    return jnp.dot(x.astype(jnp.bfloat16), w4.astype(jnp.bfloat16),
                   preferred_element_type=jnp.float32) + b4


if __name__ == "__main__":
    # MountainCar-style dims, kept small: input_dims=(2,), fc=32, n_actions=3.
    input_dim, fc1_dims, fc2_dims, fc3_dims, n_actions = 2, 32, 32, 32, 3

    key = jax.random.PRNGKey(0)
    k_state, k_state2, k1, k2, k3, k4 = jax.random.split(key, 6)

    params = {
        "fc1": init_linear(k1, input_dim, fc1_dims),
        "fc2": init_linear(k2, fc1_dims, fc2_dims),
        "fc3": init_linear(k3, fc2_dims, fc3_dims),
        "fc4": init_linear(k4, fc3_dims, n_actions),
    }

    # Primary check: tiny batch (single grid step).
    batch = 8
    state = jax.random.normal(k_state, (batch, input_dim), jnp.float32)
    actions = dqn_forward(state, params)
    jax.block_until_ready(actions)
    assert actions.shape == (batch, n_actions)

    expected = reference_forward_matched(state, params)
    assert jnp.allclose(actions, expected, atol=1e-3, rtol=1e-3), \
        "mismatch vs bf16-matched reference"
    # Loose semantic check against the original full-f32 math.
    expected_f32 = reference_forward_f32(state, params)
    assert jnp.allclose(actions, expected_f32, atol=5e-2, rtol=5e-2), \
        "mismatch vs f32 reference"

    # Secondary check: awkward batch exercises balanced tiling, padding and a
    # multi-step ("parallel") grid.
    batch2 = 200
    state2 = jax.random.normal(k_state2, (batch2, input_dim), jnp.float32)
    actions2 = dqn_forward(state2, params)
    jax.block_until_ready(actions2)
    assert actions2.shape == (batch2, n_actions)
    expected2 = reference_forward_matched(state2, params)
    assert jnp.allclose(actions2, expected2, atol=1e-3, rtol=1e-3), \
        "mismatch vs bf16-matched reference (batch=200)"

    print("KERNEL_OK")
</pallas_src>

<mosaic_0001>
module attributes {stable_mosaic.version = 11 : i64} {
  func.func @dqn_forward_kernel(%arg0: i32, %arg1: memref<8x2xf32, #tpu.memory_space<vmem>>, %arg2: memref<2x32xf32, #tpu.memory_space<vmem>>, %arg3: memref<1x32xf32, #tpu.memory_space<vmem>>, %arg4: memref<32x32xbf16, #tpu.memory_space<vmem>>, %arg5: memref<1x32xf32, #tpu.memory_space<vmem>>, %arg6: memref<32x32xbf16, #tpu.memory_space<vmem>>, %arg7: memref<1x32xf32, #tpu.memory_space<vmem>>, %arg8: memref<32x3xbf16, #tpu.memory_space<vmem>>, %arg9: memref<1x3xf32, #tpu.memory_space<vmem>>, %arg10: memref<8x3xf32, #tpu.memory_space<vmem>>) attributes {dimension_semantics = [#tpu.dimension_semantics<parallel>], iteration_bounds = array<i64: 1>, scalar_prefetch = 0 : i64, scratch_operands = 0 : i64, tpu.core_type = #tpu.core_type<tc>, window_params = [{transform_indices = @transform_0, window_bounds = array<i64: 8, 2>}, {pipeline_mode = #tpu.pipeline_mode<synchronous>, transform_indices = @transform_1, window_bounds = array<i64: 2, 32>}, {pipeline_mode = #tpu.pipeline_mode<synchronous>, transform_indices = @transform_2, window_bounds = array<i64: 1, 32>}, {pipeline_mode = #tpu.pipeline_mode<synchronous>, transform_indices = @transform_3, window_bounds = array<i64: 32, 32>}, {pipeline_mode = #tpu.pipeline_mode<synchronous>, transform_indices = @transform_4, window_bounds = array<i64: 1, 32>}, {pipeline_mode = #tpu.pipeline_mode<synchronous>, transform_indices = @transform_5, window_bounds = array<i64: 32, 32>}, {pipeline_mode = #tpu.pipeline_mode<synchronous>, transform_indices = @transform_6, window_bounds = array<i64: 1, 32>}, {pipeline_mode = #tpu.pipeline_mode<synchronous>, transform_indices = @transform_7, window_bounds = array<i64: 32, 3>}, {pipeline_mode = #tpu.pipeline_mode<synchronous>, transform_indices = @transform_8, window_bounds = array<i64: 1, 3>}, {transform_indices = @transform_9, window_bounds = array<i64: 8, 3>}]} {
    %c0 = arith.constant 0 : index
    %c0_0 = arith.constant 0 : index
    %0 = vector.load %arg1[%c0, %c0_0] : memref<8x2xf32, #tpu.memory_space<vmem>>, vector<8x2xf32>
    %c0_1 = arith.constant 0 : index
    %c0_2 = arith.constant 0 : index
    %1 = vector.load %arg3[%c0_1, %c0_2] : memref<1x32xf32, #tpu.memory_space<vmem>>, vector<1x32xf32>
    %2 = vector.extract_strided_slice %0 {offsets = [0, 0], sizes = [8, 1], strides = [1, 1]} : vector<8x2xf32> to vector<8x1xf32>
    %c0_3 = arith.constant 0 : index
    %c0_4 = arith.constant 0 : index
    %3 = vector.load %arg2[%c0_3, %c0_4] : memref<2x32xf32, #tpu.memory_space<vmem>>, vector<1x32xf32>
    %4 = vector.broadcast %2 : vector<8x1xf32> to vector<8x32xf32>
    %5 = vector.broadcast %3 : vector<1x32xf32> to vector<8x32xf32>
    %6 = arith.mulf %4, %5 : vector<8x32xf32>
    %7 = vector.broadcast %1 : vector<1x32xf32> to vector<8x32xf32>
    %8 = arith.addf %7, %6 : vector<8x32xf32>
    %9 = vector.extract_strided_slice %0 {offsets = [0, 1], sizes = [8, 1], strides = [1, 1]} : vector<8x2xf32> to vector<8x1xf32>
    %c1 = arith.constant 1 : index
    %c0_5 = arith.constant 0 : index
    %10 = vector.load %arg2[%c1, %c0_5] : memref<2x32xf32, #tpu.memory_space<vmem>>, vector<1x32xf32>
    %11 = vector.broadcast %9 : vector<8x1xf32> to vector<8x32xf32>
    %12 = vector.broadcast %10 : vector<1x32xf32> to vector<8x32xf32>
    %13 = arith.mulf %11, %12 : vector<8x32xf32>
    %14 = arith.addf %8, %13 : vector<8x32xf32>
    %cst = arith.constant 0.000000e+00 : f32
    %15 = vector.broadcast %cst : f32 to vector<8x32xf32>
    %16 = arith.maximumf %14, %15 : vector<8x32xf32>
    %17 = arith.truncf %16 : vector<8x32xf32> to vector<8x32xbf16>
    %c0_6 = arith.constant 0 : index
    %c0_7 = arith.constant 0 : index
    %18 = vector.load %arg4[%c0_6, %c0_7] : memref<32x32xbf16, #tpu.memory_space<vmem>>, vector<32x32xbf16>
    %cst_8 = arith.constant dense<0.000000e+00> : vector<8x32xf32>
    %19 = tpu.matmul %17, %18, %cst_8 {dimension_numbers = #tpu.dot_dimension_numbers<[1], [0], [0], [1], [0, 0, 1, 1], [], []>} : vector<8x32xbf16>, vector<32x32xbf16>, vector<8x32xf32> -> vector<8x32xf32>
    %c0_9 = arith.constant 0 : index
    %c0_10 = arith.constant 0 : index
    %20 = vector.load %arg5[%c0_9, %c0_10] : memref<1x32xf32, #tpu.memory_space<vmem>>, vector<1x32xf32>
    %21 = vector.broadcast %20 : vector<1x32xf32> to vector<8x32xf32>
    %22 = arith.addf %19, %21 : vector<8x32xf32>
    %cst_11 = arith.constant 0.000000e+00 : f32
    %23 = vector.broadcast %cst_11 : f32 to vector<8x32xf32>
    %24 = arith.maximumf %22, %23 : vector<8x32xf32>
    %25 = arith.truncf %24 : vector<8x32xf32> to vector<8x32xbf16>
    %c0_12 = arith.constant 0 : index
    %c0_13 = arith.constant 0 : index
    %26 = vector.load %arg6[%c0_12, %c0_13] : memref<32x32xbf16, #tpu.memory_space<vmem>>, vector<32x32xbf16>
    %cst_14 = arith.constant dense<0.000000e+00> : vector<8x32xf32>
    %27 = tpu.matmul %25, %26, %cst_14 {dimension_numbers = #tpu.dot_dimension_numbers<[1], [0], [0], [1], [0, 0, 1, 1], [], []>} : vector<8x32xbf16>, vector<32x32xbf16>, vector<8x32xf32> -> vector<8x32xf32>
    %c0_15 = arith.constant 0 : index
    %c0_16 = arith.constant 0 : index
    %28 = vector.load %arg7[%c0_15, %c0_16] : memref<1x32xf32, #tpu.memory_space<vmem>>, vector<1x32xf32>
    %29 = vector.broadcast %28 : vector<1x32xf32> to vector<8x32xf32>
    %30 = arith.addf %27, %29 : vector<8x32xf32>
    %cst_17 = arith.constant 0.000000e+00 : f32
    %31 = vector.broadcast %cst_17 : f32 to vector<8x32xf32>
    %32 = arith.maximumf %30, %31 : vector<8x32xf32>
    %33 = arith.truncf %32 : vector<8x32xf32> to vector<8x32xbf16>
    %c0_18 = arith.constant 0 : index
    %c0_19 = arith.constant 0 : index
    %34 = vector.load %arg8[%c0_18, %c0_19] : memref<32x3xbf16, #tpu.memory_space<vmem>>, vector<32x3xbf16>
    %cst_20 = arith.constant dense<0.000000e+00> : vector<8x3xf32>
    %35 = tpu.matmul %33, %34, %cst_20 {dimension_numbers = #tpu.dot_dimension_numbers<[1], [0], [0], [1], [0, 0, 1, 1], [], []>} : vector<8x32xbf16>, vector<32x3xbf16>, vector<8x3xf32> -> vector<8x3xf32>
    %c0_21 = arith.constant 0 : index
    %c0_22 = arith.constant 0 : index
    %36 = vector.load %arg9[%c0_21, %c0_22] : memref<1x3xf32, #tpu.memory_space<vmem>>, vector<1x3xf32>
    %37 = vector.broadcast %36 : vector<1x3xf32> to vector<8x3xf32>
    %38 = arith.addf %35, %37 : vector<8x3xf32>
    %c0_23 = arith.constant 0 : index
    %c0_24 = arith.constant 0 : index
    %39 = vector.load %arg10[%c0_23, %c0_24] : memref<8x3xf32, #tpu.memory_space<vmem>>, vector<8x3xf32>
    tpu.vector_store %arg10[%c0_23, %c0_24], %38 {strides = array<i32>} : memref<8x3xf32, #tpu.memory_space<vmem>>, vector<8x3xf32>,
    return
  }
  func.func @transform_0(%arg0: i32) -> (i32, i32) {
    %c0_i32 = arith.constant 0 : i32
    %c0_i32_0 = arith.constant 0 : i32
    return %arg0, %c0_i32 : i32, i32
  }
  func.func @transform_1(%arg0: i32) -> (i32, i32) {
    %c0_i32 = arith.constant 0 : i32
    %c0_i32_0 = arith.constant 0 : i32
    %c0_i32_1 = arith.constant 0 : i32
    return %c0_i32, %c0_i32_0 : i32, i32
  }
  func.func @transform_2(%arg0: i32) -> (i32, i32) {
    %c0_i32 = arith.constant 0 : i32
    %c0_i32_0 = arith.constant 0 : i32
    %c0_i32_1 = arith.constant 0 : i32
    return %c0_i32, %c0_i32_0 : i32, i32
  }
  func.func @transform_3(%arg0: i32) -> (i32, i32) {
    %c0_i32 = arith.constant 0 : i32
    %c0_i32_0 = arith.constant 0 : i32
    %c0_i32_1 = arith.constant 0 : i32
    return %c0_i32, %c0_i32_0 : i32, i32
  }
  func.func @transform_4(%arg0: i32) -> (i32, i32) {
    %c0_i32 = arith.constant 0 : i32
    %c0_i32_0 = arith.constant 0 : i32
    %c0_i32_1 = arith.constant 0 : i32
    return %c0_i32, %c0_i32_0 : i32, i32
  }
  func.func @transform_5(%arg0: i32) -> (i32, i32) {
    %c0_i32 = arith.constant 0 : i32
    %c0_i32_0 = arith.constant 0 : i32
    %c0_i32_1 = arith.constant 0 : i32
    return %c0_i32, %c0_i32_0 : i32, i32
  }
  func.func @transform_6(%arg0: i32) -> (i32, i32) {
    %c0_i32 = arith.constant 0 : i32
    %c0_i32_0 = arith.constant 0 : i32
    %c0_i32_1 = arith.constant 0 : i32
    return %c0_i32, %c0_i32_0 : i32, i32
  }
  func.func @transform_7(%arg0: i32) -> (i32, i32) {
    %c0_i32 = arith.constant 0 : i32
    %c0_i32_0 = arith.constant 0 : i32
    %c0_i32_1 = arith.constant 0 : i32
    return %c0_i32, %c0_i32_0 : i32, i32
  }
  func.func @transform_8(%arg0: i32) -> (i32, i32) {
    %c0_i32 = arith.constant 0 : i32
    %c0_i32_0 = arith.constant 0 : i32
    %c0_i32_1 = arith.constant 0 : i32
    return %c0_i32, %c0_i32_0 : i32, i32
  }
  func.func @transform_9(%arg0: i32) -> (i32, i32) {
    %c0_i32 = arith.constant 0 : i32
    %c0_i32_0 = arith.constant 0 : i32
    return %arg0, %c0_i32 : i32, i32
  }
}

</mosaic_0001>

<llo_original>
// kernel: tpu_custom_call.1
$region0: #{tpu_custom_call.1}
  #allocation0 [shape = 'u32[]', space=smem, size = 0x4, offset = 0x4, fixed_abs, tag = 'smem constant byte address 0x4 - core index']
  #allocation1 [shape = 'u32[144,128]{1,0:T(1,128)}', space=vmem, size = 0x12000, scoped, tag = 'internal scratch']
  %s0 = inlined_call_operand.vmem [shape: f32[8,2], index: 0, kind: input, shape index: {}]
  %s1 = inlined_call_operand.hbm [shape: f32[2,32], index: 1, kind: input, shape index: {}]
  %s2 = inlined_call_operand.vmem [shape: f32[1,32], index: 2, kind: input, shape index: {}]
  %s3 = inlined_call_operand.vmem [shape: bf16[32,32], index: 3, kind: input, shape index: {}]
  %s4 = inlined_call_operand.hbm [shape: f32[1,32], index: 4, kind: input, shape index: {}]
  %s5 = inlined_call_operand.vmem [shape: bf16[32,32], index: 5, kind: input, shape index: {}]
  %s6 = inlined_call_operand.vmem [shape: f32[1,32], index: 6, kind: input, shape index: {}]
  %s7 = inlined_call_operand.vmem [shape: bf16[32,3], index: 7, kind: input, shape index: {}]
  %s8 = inlined_call_operand.vmem [shape: f32[1,3], index: 8, kind: input, shape index: {}]
  %s9 = inlined_call_operand.vmem [shape: f32[8,3], index: 9, kind: output, shape index: {}]
  %s10 = sld [smem:[#allocation0]]
  $region54: #{tpu_custom_call.1} parent=0
    _
  %s12 = ssub.s32 1, %s10
  %s13 = scalar_select 0, %s12, %s10
  $region1: #{tpu_custom_call.1} parent=0
    #allocation2 [shape = 'u8[1024]{0}', space=vmem, size = 0x400, scoped, tag = 'input window, operand 1, single buffered']
    #allocation3 [shape = 's32[1]{0}', space=sflag, size = 0x4, scoped, tag = 'scoped memory for tpu_custom_call.1']
    #allocation4 [shape = 'u8[512]{0}', space=vmem, size = 0x400, scoped, tag = 'input window, operand 4, single buffered']
    #allocation5 [shape = 's32[1]{0}', space=sflag, size = 0x4, scoped, tag = 'scoped memory for tpu_custom_call.1']
    %14 = vsyncpa [#allocation3], 0
    %15 = vsyncpa [#allocation5], 0
    // Predicated region
    $region2: #{tpu_custom_call.1} parent=1 // pred_check
      _
    $region3: #{tpu_custom_call.1} parent=1 // pred_check_branch
      %17 = sbr.rel (0) target = $region5
    $region4: #{tpu_custom_call.1} parent=1 // pred_region
      _
    $region5: #{tpu_custom_call.1} parent=1 // pred_fallthru
      _
    // Predicated region
    $region6: #{tpu_custom_call.1} parent=1 // pred_check
      _
    $region7: #{tpu_custom_call.1} parent=1 // pred_check_branch
      %19 = sbr.rel (0) target = $region9
    $region8: #{tpu_custom_call.1} parent=1 // pred_region
      %s21 = ssub.s32 32, 32
      %22 = vsyncadd [#allocation3], %s21
      %s24 = sshll.u32 [#allocation2], 4
      %s25 = int_to_ptr.vmem [resolvable:$true] %s24
      %27 = dma.hbm_to_vmem [thread:$0]  %s1, 32, %s25, [#allocation3]
    $region9: #{tpu_custom_call.1} parent=1 // pred_fallthru
      _
    // Predicated region
    $region10: #{tpu_custom_call.1} parent=1 // pred_check
      _
    $region11: #{tpu_custom_call.1} parent=1 // pred_check_branch
      %29 = sbr.rel (0) target = $region13
    $region12: #{tpu_custom_call.1} parent=1 // pred_region
      _
    $region13: #{tpu_custom_call.1} parent=1 // pred_fallthru
      _
    // Predicated region
    $region14: #{tpu_custom_call.1} parent=1 // pred_check
      _
    $region15: #{tpu_custom_call.1} parent=1 // pred_check_branch
      %31 = sbr.rel (0) target = $region17
    $region16: #{tpu_custom_call.1} parent=1 // pred_region
      _
    $region17: #{tpu_custom_call.1} parent=1 // pred_fallthru
      _
    // Predicated region
    $region18: #{tpu_custom_call.1} parent=1 // pred_check
      _
    $region19: #{tpu_custom_call.1} parent=1 // pred_check_branch
      %33 = sbr.rel (0) target = $region21
    $region20: #{tpu_custom_call.1} parent=1 // pred_region
      %s35 = ssub.s32 16, 16
      %36 = vsyncadd [#allocation5], %s35
      %s38 = sshll.u32 [#allocation4], 4
      %s39 = int_to_ptr.vmem [resolvable:$true] %s38
      %41 = dma.hbm_to_vmem [thread:$0]  %s4, 16, %s39, [#allocation5]
    $region21: #{tpu_custom_call.1} parent=1 // pred_fallthru
      _
    // Predicated region
    $region22: #{tpu_custom_call.1} parent=1 // pred_check
      _
    $region23: #{tpu_custom_call.1} parent=1 // pred_check_branch
      %43 = sbr.rel (0) target = $region25
    $region24: #{tpu_custom_call.1} parent=1 // pred_region
      _
    $region25: #{tpu_custom_call.1} parent=1 // pred_fallthru
      _
    // Predicated region
    $region26: #{tpu_custom_call.1} parent=1 // pred_check
      _
    $region27: #{tpu_custom_call.1} parent=1 // pred_check_branch
      %45 = sbr.rel (0) target = $region29
    $region28: #{tpu_custom_call.1} parent=1 // pred_region
      _
    $region29: #{tpu_custom_call.1} parent=1 // pred_fallthru
      _
    // Predicated region
    $region30: #{tpu_custom_call.1} parent=1 // pred_check
      _
    $region31: #{tpu_custom_call.1} parent=1 // pred_check_branch
      %47 = sbr.rel (0) target = $region33
    $region32: #{tpu_custom_call.1} parent=1 // pred_region
      _
    $region33: #{tpu_custom_call.1} parent=1 // pred_fallthru
      _
    // Predicated region
    $region34: #{tpu_custom_call.1} parent=1 // pred_check
      _
    $region35: #{tpu_custom_call.1} parent=1 // pred_check_branch
      %49 = sbr.rel (0) target = $region37
    $region36: #{tpu_custom_call.1} parent=1 // pred_region
      _
    $region37: #{tpu_custom_call.1} parent=1 // pred_fallthru
      _
    // Predicated region
    $region38: #{tpu_custom_call.1} parent=1 // pred_check
      _
    $region39: #{tpu_custom_call.1} parent=1 // pred_check_branch
      %51 = sbr.rel (0) target = $region41
    $region40: #{tpu_custom_call.1} parent=1 // pred_region
      %52 = dma.done [#allocation3], 32
    $region41: #{tpu_custom_call.1} parent=1 // pred_fallthru
      _
    // Predicated region
    $region42: #{tpu_custom_call.1} parent=1 // pred_check
      _
    $region43: #{tpu_custom_call.1} parent=1 // pred_check_branch
      %54 = sbr.rel (0) target = $region45
    $region44: #{tpu_custom_call.1} parent=1 // pred_region
      %55 = dma.done [#allocation5], 16
    $region45: #{tpu_custom_call.1} parent=1 // pred_fallthru
      _
    %v57 = vld [vmem:[%s0] sm:$0xff]
    %v58 = vld [vmem:[%s2] sm:$0x1]
    %v59 = vld [vmem:[#allocation2] sm:$0x1]
    %61 = vset.pattern.permute.xlu0 0
    %62 = vperm.xlu0 %61, %v57
    %v63 = vpop.permute.xlu0 %62
    %v65 = vlaneseq
    %v66 = vshrl.u32 %v65, 7
    %v67 = vsub.s32 0, %v66
    %v68 = vrot.slane %v59, %v67
    %v69 = vmul.f32 %v63, %v68
    %v71 = vlaneseq
    %v72 = vshrl.u32 %v71, 7
    %v73 = vsub.s32 0, %v72
    %v74 = vrot.slane %v58, %v73
    %v76 = vadd.f32 %v74, %v69
    %v77 = vld [vmem:[#allocation2 + $0x1] sm:$0x1]
    %78 = vset.pattern.permute.xlu0 1
    %79 = vperm.xlu0 %78, %v57
    %v80 = vpop.permute.xlu0 %79
    %v82 = vlaneseq
    %v83 = vshrl.u32 %v82, 7
    %v84 = vsub.s32 0, %v83
    %v85 = vrot.slane %v77, %v84
    %v86 = vmul.f32 %v80, %v85
    %v87 = vadd.f32 %v76, %v86
    %v88 = vmax.f32 %v87, 0.0
    %v89 = vpack.c.bf16 %v88, %v88
    %v90 = vld [vmem:[%s3] sm:$0xf]
    %v91 = vld [vmem:[%s3 + $0x4] sm:$0xf]
    %v92 = vld [vmem:[%s3 + $0x8] sm:$0xf]
    %v93 = vld [vmem:[%s3 + $0xc] sm:$0xf]
    %v94 = vld [vmem:[#allocation4] sm:$0x1]
    %v96 = vlaneseq
    %v97 = vshrl.u32 %v96, 7
    %v98 = vsub.s32 0, %v97
    %v99 = vrot.slane %v94, %v98
    %v105 = vunpack.c.l.b16 %v90
    %v106 = vunpack.c.l.b16 %v91
    %v107 = vunpack.c.l.b16 %v92
    %v108 = vunpack.c.l.b16 %v93
    %v109 = vpack.c.b16 %v106, %v105
    %v110 = vpack.c.b16 %v108, %v107
    %vm113 = vcmask 261120
    %v115 = vsel %vm113, %v89, 0
    %117 = vmatprep.subr.bf16.mxu0 0
    %118 = vmatpush1.bf16.msra.mxu0 0
    %119 = vmatprep.subr.bf16.mxu0 0
    %120 = vmatpush1.bf16.msra.mxu0 0
    %121 = vmatprep.subr.bf16.mxu0 0
    %122 = vmatpush1.bf16.msra.mxu0 0
    %123 = vmatprep.subr.bf16.mxu0 0
    %124 = vmatpush1.bf16.msra.mxu0 0
    %125 = vmatprep.subr.bf16.mxu0 0
    %126 = vmatpush1.bf16.msra.mxu0 0
    %127 = vmatprep.subr.bf16.mxu0 0
    %128 = vmatpush1.bf16.msra.mxu0 0
    %129 = vmatprep.subr.bf16.mxu0 0
    %130 = vmatpush1.bf16.msra.mxu0 %v110
    %131 = vmatprep.subr.bf16.mxu0 0
    %132 = vmatpush1.bf16.msra.mxu0 %v109
    %133 = vmatprep.subr.bf16.mxu0 0
    %134 = vmatpush2.bf16.msra.mxu0 0
    %135 = vmatprep.subr.bf16.mxu0 0
    %136 = vmatpush2.bf16.msra.mxu0 0
    %137 = vmatprep.subr.bf16.mxu0 0
    %138 = vmatpush2.bf16.msra.mxu0 0
    %139 = vmatprep.subr.bf16.mxu0 0
    %140 = vmatpush2.bf16.msra.mxu0 0
    %141 = vmatprep.subr.bf16.mxu0 0
    %142 = vmatpush2.bf16.msra.mxu0 0
    %143 = vmatprep.subr.bf16.mxu0 0
    %144 = vmatpush2.bf16.msra.mxu0 0
    %145 = vmatprep.subr.bf16.mxu0 0
    %146 = vmatpush2.bf16.msra.mxu0 0
    %147 = vmatprep.subr.bf16.mxu0 0
    %148 = vmatpush2.bf16.msra.mxu0 0
    %149 = vmatprep.mubr.bf16.mxu0 0
    %150 = vmatmul.mubr.bf16.gmra.mxu0 %v115
    %v151 = vpop.f32.mrf.mxu0
    %v152 = vadd.f32 %v99, %v151
    %v153 = vpop.f32.mrf.mxu0
    %v154 = vpop.f32.mrf.mxu0
    %v155 = vpop.f32.mrf.mxu0
    %156 = vdwg.mxu0
    %v157 = vmax.f32 %v152, 0.0
    %v158 = vpack.c.bf16 %v157, %v157
    %v159 = vld [vmem:[%s5] sm:$0xf]
    %v160 = vld [vmem:[%s5 + $0x4] sm:$0xf]
    %v161 = vld [vmem:[%s5 + $0x8] sm:$0xf]
    %v162 = vld [vmem:[%s5 + $0xc] sm:$0xf]
    %v163 = vld [vmem:[%s6] sm:$0x1]
    %v165 = vlaneseq
    %v166 = vshrl.u32 %v165, 7
    %v167 = vsub.s32 0, %v166
    %v168 = vrot.slane %v163, %v167
    %v174 = vunpack.c.l.b16 %v159
    %v175 = vunpack.c.l.b16 %v160
    %v176 = vunpack.c.l.b16 %v161
    %v177 = vunpack.c.l.b16 %v162
    %v178 = vpack.c.b16 %v175, %v174
    %v179 = vpack.c.b16 %v177, %v176
    %v183 = vsel %vm113, %v158, 0
    %185 = vmatprep.subr.bf16.mxu0 0
    %186 = vmatpush1.bf16.msra.mxu0 0
    %187 = vmatprep.subr.bf16.mxu0 0
    %188 = vmatpush1.bf16.msra.mxu0 0
    %189 = vmatprep.subr.bf16.mxu0 0
    %190 = vmatpush1.bf16.msra.mxu0 0
    %191 = vmatprep.subr.bf16.mxu0 0
    %192 = vmatpush1.bf16.msra.mxu0 0
    %193 = vmatprep.subr.bf16.mxu0 0
    %194 = vmatpush1.bf16.msra.mxu0 0
    %195 = vmatprep.subr.bf16.mxu0 0
    %196 = vmatpush1.bf16.msra.mxu0 0
    %197 = vmatprep.subr.bf16.mxu0 0
    %198 = vmatpush1.bf16.msra.mxu0 %v179
    %199 = vmatprep.subr.bf16.mxu0 0
    %200 = vmatpush1.bf16.msra.mxu0 %v178
    %201 = vmatprep.subr.bf16.mxu0 0
    %202 = vmatpush2.bf16.msra.mxu0 0
    %203 = vmatprep.subr.bf16.mxu0 0
    %204 = vmatpush2.bf16.msra.mxu0 0
    %205 = vmatprep.subr.bf16.mxu0 0
    %206 = vmatpush2.bf16.msra.mxu0 0
    %207 = vmatprep.subr.bf16.mxu0 0
    %208 = vmatpush2.bf16.msra.mxu0 0
    %209 = vmatprep.subr.bf16.mxu0 0
    %210 = vmatpush2.bf16.msra.mxu0 0
    %211 = vmatprep.subr.bf16.mxu0 0
    %212 = vmatpush2.bf16.msra.mxu0 0
    %213 = vmatprep.subr.bf16.mxu0 0
    %214 = vmatpush2.bf16.msra.mxu0 0
    %215 = vmatprep.subr.bf16.mxu0 0
    %216 = vmatpush2.bf16.msra.mxu0 0
    %217 = vmatprep.mubr.bf16.mxu0 0
    %218 = vmatmul.mubr.bf16.gmra.mxu0 %v183
    %v219 = vpop.f32.mrf.mxu0
    %v220 = vadd.f32 %v168, %v219
    %v221 = vpop.f32.mrf.mxu0
    %v222 = vpop.f32.mrf.mxu0
    %v223 = vpop.f32.mrf.mxu0
    %224 = vdwg.mxu0
    %v225 = vmax.f32 %v220, 0.0
    %v226 = vpack.c.bf16 %v225, %v225
    %v227 = vld [vmem:[%s7] sm:$0xf]
    %v228 = vld [vmem:[%s7 + $0x4] sm:$0xf]
    %v229 = vld [vmem:[%s7 + $0x8] sm:$0xf]
    %v230 = vld [vmem:[%s7 + $0xc] sm:$0xf]
    %v231 = vld [vmem:[%s8] sm:$0x1]
    %v233 = vlaneseq
    %v234 = vshrl.u32 %v233, 7
    %v235 = vsub.s32 0, %v234
    %v236 = vrot.slane %v231, %v235
    %v242 = vunpack.c.l.b16 %v227
    %v243 = vunpack.c.l.b16 %v228
    %v244 = vunpack.c.l.b16 %v229
    %v245 = vunpack.c.l.b16 %v230
    %v246 = vpack.c.b16 %v243, %v242
    %v247 = vpack.c.b16 %v245, %v244
    %v251 = vsel %vm113, %v226, 0
    %253 = vmatprep.subr.bf16.mxu0 0
    %254 = vmatpush1.bf16.msra.mxu0 0
    %255 = vmatprep.subr.bf16.mxu0 0
    %256 = vmatpush1.bf16.msra.mxu0 0
    %257 = vmatprep.subr.bf16.mxu0 0
    %258 = vmatpush1.bf16.msra.mxu0 0
    %259 = vmatprep.subr.bf16.mxu0 0
    %260 = vmatpush1.bf16.msra.mxu0 0
    %261 = vmatprep.subr.bf16.mxu0 0
    %262 = vmatpush1.bf16.msra.mxu0 0
    %263 = vmatprep.subr.bf16.mxu0 0
    %264 = vmatpush1.bf16.msra.mxu0 0
    %265 = vmatprep.subr.bf16.mxu0 0
    %266 = vmatpush1.bf16.msra.mxu0 %v247
    %267 = vmatprep.subr.bf16.mxu0 0
    %268 = vmatpush1.bf16.msra.mxu0 %v246
    %269 = vmatprep.subr.bf16.mxu0 0
    %270 = vmatpush2.bf16.msra.mxu0 0
    %271 = vmatprep.subr.bf16.mxu0 0
    %272 = vmatpush2.bf16.msra.mxu0 0
    %273 = vmatprep.subr.bf16.mxu0 0
    %274 = vmatpush2.bf16.msra.mxu0 0
    %275 = vmatprep.subr.bf16.mxu0 0
    %276 = vmatpush2.bf16.msra.mxu0 0
    %277 = vmatprep.subr.bf16.mxu0 0
    %278 = vmatpush2.bf16.msra.mxu0 0
    %279 = vmatprep.subr.bf16.mxu0 0
    %280 = vmatpush2.bf16.msra.mxu0 0
    %281 = vmatprep.subr.bf16.mxu0 0
    %282 = vmatpush2.bf16.msra.mxu0 0
    %283 = vmatprep.subr.bf16.mxu0 0
    %284 = vmatpush2.bf16.msra.mxu0 0
    %285 = vmatprep.mubr.bf16.mxu0 0
    %286 = vmatmul.mubr.bf16.gmra.mxu0 %v251
    %v287 = vpop.f32.mrf.mxu0
    %v288 = vadd.f32 %v236, %v287
    %v289 = vpop.f32.mrf.mxu0
    %v290 = vpop.f32.mrf.mxu0
    %v291 = vpop.f32.mrf.mxu0
    %292 = vdwg.mxu0
    %vm293 = vcmask 23552
    %294 = vst.msk [vmem:[%s9] sm:$0xff] %vm293, %v288
    // Predicated region
    $region46: #{tpu_custom_call.1} parent=1 // pred_check
      _
    $region47: #{tpu_custom_call.1} parent=1 // pred_check_branch
      %296 = sbr.rel (0) target = $region49
    $region48: #{tpu_custom_call.1} parent=1 // pred_region
      _
    $region49: #{tpu_custom_call.1} parent=1 // pred_fallthru
      _
    // Predicated region
    $region50: #{tpu_custom_call.1} parent=1 // pred_check
      _
    $region51: #{tpu_custom_call.1} parent=1 // pred_check_branch
      %298 = sbr.rel (0) target = $region53
    $region52: #{tpu_custom_call.1} parent=1 // pred_region
      _
    $region53: #{tpu_custom_call.1} parent=1 // pred_fallthru
      _
    %299 = vsyncpa [#allocation3], 1
    %300 = vsyncpa [#allocation5], 1

</llo_original>
